<compile_context>
chip_gen: v5e
topology: v5e:2x2
jax: 0.10.0
libtpu: 0.0.40
codegen_flags: <defaults>
</compile_context>

<pallas_src>
import functools

import jax
import jax.numpy as jnp
from jax import lax
from jax.experimental import pallas as pl
from jax.experimental.pallas import tpu as pltpu


def _lstm_kernel(x_ref, h0_ref, c0_ref, wgh_ref, wgx_ref, bg_ref,
                 wo_ref, bo_ref,
                 logp_ref, hN_ref, cN_ref,
                 xproj_ref, hseq_ref,
                 *, seq_len: int, hidden: int):
    """Whole recurrence + batched output projection + log_softmax."""
    H = hidden

    # ---- Prologue: hoist the input projection (+ gate bias) out of the
    # recurrence.  One (seq, I) @ (I, 4H) MXU op instead of seq tiny ones.
    xproj_ref[...] = (
        jnp.dot(x_ref[...], wgx_ref[...], preferred_element_type=jnp.float32)
        + bg_ref[...])                                   # (seq, 4H)

    wgh = wgh_ref[...]                                   # (H, 4H), loop-invariant

    # ---- Serial recurrence (only the truly recurrent h @ Wg_h term).
    def step(t, carry):
        h, c = carry                                     # (1, H), (1, H)
        gates = (jnp.dot(h, wgh, preferred_element_type=jnp.float32)
                 + xproj_ref[pl.ds(t, 1), :])            # (1, 4H)

        # Full-vreg nonlinearities (2 EUP pushes instead of 4 lane-sparse).
        sig = jax.nn.sigmoid(gates)
        tnh = jnp.tanh(gates)
        f_t = sig[:, 0 * H:1 * H]
        i_t = sig[:, 1 * H:2 * H]
        g_t = tnh[:, 2 * H:3 * H]
        o_t = sig[:, 3 * H:4 * H]

        c_new = f_t * c + i_t * g_t
        h_new = o_t * jnp.tanh(c_new)

        hseq_ref[pl.ds(t, 1), :] = h_new                 # stash h_t; no per-step softmax
        return (h_new, c_new)

    h_fin, c_fin = lax.fori_loop(0, seq_len, step,
                                 (h0_ref[...], c0_ref[...]),
                                 unroll=True)
    hN_ref[...] = h_fin
    cN_ref[...] = c_fin

    # ---- Epilogue: batched output projection + log_softmax, single store.
    logits = (jnp.dot(hseq_ref[...], wo_ref[...],
                      preferred_element_type=jnp.float32)
              + bo_ref[...])                             # (seq, O)
    m = jnp.max(logits, axis=-1, keepdims=True)
    z = logits - m
    lse = jnp.log(jnp.sum(jnp.exp(z), axis=-1, keepdims=True))
    logp_ref[...] = z - lse


def manual_lstm_forward(x, h0, c0, w_gates, b_gates, w_out, b_out):
    """x: (seq, 1, I); h0, c0: (1, 1, H); w_gates: (H+I, 4H); w_out: (H, O).

    Returns (log_probs (seq, 1, O), (h_final (1,1,H), c_final (1,1,H)))
    matching ManualLSTM.forward.
    """
    seq_len, _, input_size = x.shape
    hidden = h0.shape[-1]
    out_size = w_out.shape[-1]

    x2d = x.reshape(seq_len, input_size).astype(jnp.float32)
    h0_2d = h0.reshape(1, hidden).astype(jnp.float32)
    c0_2d = c0.reshape(1, hidden).astype(jnp.float32)
    wg_h = w_gates[:hidden, :]          # acts on h_prev (h comes first in cat)
    wg_x = w_gates[hidden:, :]          # acts on x_t
    bg = b_gates.reshape(1, 4 * hidden)
    bo = b_out.reshape(1, out_size)

    vmem = pl.BlockSpec(memory_space=pltpu.MemorySpace.VMEM)

    kernel = functools.partial(_lstm_kernel, seq_len=seq_len, hidden=hidden)

    logp2d, h_fin, c_fin = pl.pallas_call(
        kernel,
        out_shape=(
            jax.ShapeDtypeStruct((seq_len, out_size), jnp.float32),
            jax.ShapeDtypeStruct((1, hidden), jnp.float32),
            jax.ShapeDtypeStruct((1, hidden), jnp.float32),
        ),
        in_specs=[vmem] * 8,
        out_specs=(vmem, vmem, vmem),
        scratch_shapes=[
            pltpu.VMEM((seq_len, 4 * hidden), jnp.float32),   # hoisted x-projection
            pltpu.VMEM((seq_len, hidden), jnp.float32),       # per-step h_t stash
        ],
    )(x2d, h0_2d, c0_2d, wg_h, wg_x, bg, w_out, bo)

    return (logp2d.reshape(seq_len, 1, out_size),
            (h_fin.reshape(1, 1, hidden), c_fin.reshape(1, 1, hidden)))


def manual_lstm_reference(x, h0, c0, w_gates, b_gates, w_out, b_out):
    """Pure-JAX reference mirroring the PyTorch loop."""
    seq_len, _, input_size = x.shape
    H = h0.shape[-1]
    h = h0.reshape(1, H)
    c = c0.reshape(1, H)
    outs = []
    for t in range(seq_len):
        x_t = x[t].reshape(1, input_size)
        combined = jnp.concatenate([h, x_t], axis=1)
        g = combined @ w_gates + b_gates
        f_t = jax.nn.sigmoid(g[:, :H])
        i_t = jax.nn.sigmoid(g[:, H:2 * H])
        g_t = jnp.tanh(g[:, 2 * H:3 * H])
        o_t = jax.nn.sigmoid(g[:, 3 * H:])
        c = f_t * c + i_t * g_t
        h = o_t * jnp.tanh(c)
        outs.append(h)
    seq_h = jnp.stack(outs, axis=0)                    # (seq, 1, H)
    logits = seq_h @ w_out + b_out
    logp = jax.nn.log_softmax(logits, axis=-1)
    return logp, (h.reshape(1, 1, H), c.reshape(1, 1, H))


if __name__ == "__main__":
    seq_len, input_size, hidden_size, output_size = 8, 16, 32, 10

    key = jax.random.PRNGKey(0)
    k_x, k_wg, k_bg, k_wo, k_bo = jax.random.split(key, 5)

    # Deterministic parameter init (uniform like nn.Linear's default scale).
    fan_g = input_size + hidden_size
    w_gates = jax.random.uniform(k_wg, (fan_g, 4 * hidden_size),
                                 minval=-1.0, maxval=1.0,
                                 dtype=jnp.float32) / jnp.sqrt(float(fan_g))
    b_gates = jax.random.uniform(k_bg, (4 * hidden_size,),
                                 minval=-1.0, maxval=1.0,
                                 dtype=jnp.float32) / jnp.sqrt(float(fan_g))
    w_out = jax.random.uniform(k_wo, (hidden_size, output_size),
                               minval=-1.0, maxval=1.0,
                               dtype=jnp.float32) / jnp.sqrt(float(hidden_size))
    b_out = jax.random.uniform(k_bo, (output_size,),
                               minval=-1.0, maxval=1.0,
                               dtype=jnp.float32) / jnp.sqrt(float(hidden_size))

    x = jax.random.normal(k_x, (seq_len, 1, input_size), dtype=jnp.float32)
    h0 = jnp.zeros((1, 1, hidden_size), dtype=jnp.float32)
    c0 = jnp.zeros((1, 1, hidden_size), dtype=jnp.float32)

    logp, (h_fin, c_fin) = manual_lstm_forward(
        x, h0, c0, w_gates, b_gates, w_out, b_out)
    jax.block_until_ready((logp, h_fin, c_fin))

    logp_ref, (h_ref, c_ref) = manual_lstm_reference(
        x, h0, c0, w_gates, b_gates, w_out, b_out)

    assert logp.shape == (seq_len, 1, output_size)
    assert h_fin.shape == (1, 1, hidden_size) and c_fin.shape == (1, 1, hidden_size)
    assert jnp.allclose(logp, logp_ref, atol=1e-3, rtol=1e-3)
    assert jnp.allclose(h_fin, h_ref, atol=1e-3, rtol=1e-3)
    assert jnp.allclose(c_fin, c_ref, atol=1e-3, rtol=1e-3)

    print("KERNEL_OK")
</pallas_src>

<mosaic_0001>
module attributes {stable_mosaic.version = 11 : i64} {
  func.func @_lstm_kernel(%arg0: memref<8x16xf32, #tpu.memory_space<vmem>>, %arg1: memref<1x32xf32, #tpu.memory_space<vmem>>, %arg2: memref<1x32xf32, #tpu.memory_space<vmem>>, %arg3: memref<32x128xf32, #tpu.memory_space<vmem>>, %arg4: memref<16x128xf32, #tpu.memory_space<vmem>>, %arg5: memref<1x128xf32, #tpu.memory_space<vmem>>, %arg6: memref<32x10xf32, #tpu.memory_space<vmem>>, %arg7: memref<1x10xf32, #tpu.memory_space<vmem>>, %arg8: memref<8x10xf32, #tpu.memory_space<vmem>>, %arg9: memref<1x32xf32, #tpu.memory_space<vmem>>, %arg10: memref<1x32xf32, #tpu.memory_space<vmem>>, %arg11: memref<8x128xf32, #tpu.memory_space<vmem>>, %arg12: memref<8x32xf32, #tpu.memory_space<vmem>>) attributes {dimension_semantics = [], scalar_prefetch = 0 : i64, scratch_operands = 2 : i64, tpu.core_type = #tpu.core_type<tc>} {
    %c0 = arith.constant 0 : index
    %c0_0 = arith.constant 0 : index
    %0 = vector.load %arg0[%c0, %c0_0] : memref<8x16xf32, #tpu.memory_space<vmem>>, vector<8x16xf32>
    %c0_1 = arith.constant 0 : index
    %c0_2 = arith.constant 0 : index
    %1 = vector.load %arg4[%c0_1, %c0_2] : memref<16x128xf32, #tpu.memory_space<vmem>>, vector<16x128xf32>
    %cst = arith.constant dense<0.000000e+00> : vector<8x128xf32>
    %2 = tpu.matmul %0, %1, %cst {dimension_numbers = #tpu.dot_dimension_numbers<[1], [0], [0], [1], [0, 0, 1, 1], [], []>} : vector<8x16xf32>, vector<16x128xf32>, vector<8x128xf32> -> vector<8x128xf32>
    %c0_3 = arith.constant 0 : index
    %c0_4 = arith.constant 0 : index
    %3 = vector.load %arg5[%c0_3, %c0_4] : memref<1x128xf32, #tpu.memory_space<vmem>>, vector<1x128xf32>
    %4 = vector.broadcast %3 : vector<1x128xf32> to vector<8x128xf32>
    %5 = arith.addf %2, %4 : vector<8x128xf32>
    %c0_5 = arith.constant 0 : index
    %c0_6 = arith.constant 0 : index
    %6 = vector.load %arg11[%c0_5, %c0_6] : memref<8x128xf32, #tpu.memory_space<vmem>>, vector<8x128xf32>
    tpu.vector_store %arg11[%c0_5, %c0_6], %5 {strides = array<i32>} : memref<8x128xf32, #tpu.memory_space<vmem>>, vector<8x128xf32>,
    %c0_7 = arith.constant 0 : index
    %c0_8 = arith.constant 0 : index
    %7 = vector.load %arg3[%c0_7, %c0_8] : memref<32x128xf32, #tpu.memory_space<vmem>>, vector<32x128xf32>
    %c0_9 = arith.constant 0 : index
    %c0_10 = arith.constant 0 : index
    %8 = vector.load %arg1[%c0_9, %c0_10] : memref<1x32xf32, #tpu.memory_space<vmem>>, vector<1x32xf32>
    %c0_11 = arith.constant 0 : index
    %c0_12 = arith.constant 0 : index
    %9 = vector.load %arg2[%c0_11, %c0_12] : memref<1x32xf32, #tpu.memory_space<vmem>>, vector<1x32xf32>
    %c0_i32 = arith.constant 0 : i32
    %cst_13 = arith.constant dense<0.000000e+00> : vector<1x128xf32>
    %10 = tpu.matmul %8, %7, %cst_13 {dimension_numbers = #tpu.dot_dimension_numbers<[1], [0], [0], [1], [0, 0, 1, 1], [], []>} : vector<1x32xf32>, vector<32x128xf32>, vector<1x128xf32> -> vector<1x128xf32>
    %11 = arith.index_cast %c0_i32 : i32 to index
    %c0_14 = arith.constant 0 : index
    %12 = vector.load %arg11[%11, %c0_14] : memref<8x128xf32, #tpu.memory_space<vmem>>, vector<1x128xf32>
    %13 = arith.addf %10, %12 : vector<1x128xf32>
    %14 = arith.negf %13 : vector<1x128xf32>
    %15 = math.exp %14 : vector<1x128xf32>
    %cst_15 = arith.constant 1.000000e+00 : f32
    %16 = vector.broadcast %cst_15 : f32 to vector<1x128xf32>
    %17 = arith.addf %16, %15 : vector<1x128xf32>
    %18 = arith.divf %16, %17 : vector<1x128xf32>
    %19 = math.tanh %13 : vector<1x128xf32>
    %20 = vector.extract_strided_slice %18 {offsets = [0, 0], sizes = [1, 32], strides = [1, 1]} : vector<1x128xf32> to vector<1x32xf32>
    %21 = vector.extract_strided_slice %18 {offsets = [0, 32], sizes = [1, 32], strides = [1, 1]} : vector<1x128xf32> to vector<1x32xf32>
    %22 = vector.extract_strided_slice %19 {offsets = [0, 64], sizes = [1, 32], strides = [1, 1]} : vector<1x128xf32> to vector<1x32xf32>
    %23 = vector.extract_strided_slice %18 {offsets = [0, 96], sizes = [1, 32], strides = [1, 1]} : vector<1x128xf32> to vector<1x32xf32>
    %24 = arith.mulf %20, %9 : vector<1x32xf32>
    %25 = arith.mulf %21, %22 : vector<1x32xf32>
    %26 = arith.addf %24, %25 : vector<1x32xf32>
    %27 = math.tanh %26 : vector<1x32xf32>
    %28 = arith.mulf %23, %27 : vector<1x32xf32>
    %29 = arith.index_cast %c0_i32 : i32 to index
    %c0_16 = arith.constant 0 : index
    %30 = vector.load %arg12[%29, %c0_16] : memref<8x32xf32, #tpu.memory_space<vmem>>, vector<1x32xf32>
    tpu.vector_store %arg12[%29, %c0_16], %28 {strides = array<i32>} : memref<8x32xf32, #tpu.memory_space<vmem>>, vector<1x32xf32>,
    %c1_i32 = arith.constant 1 : i32
    %cst_17 = arith.constant dense<0.000000e+00> : vector<1x128xf32>
    %31 = tpu.matmul %28, %7, %cst_17 {dimension_numbers = #tpu.dot_dimension_numbers<[1], [0], [0], [1], [0, 0, 1, 1], [], []>} : vector<1x32xf32>, vector<32x128xf32>, vector<1x128xf32> -> vector<1x128xf32>
    %32 = arith.index_cast %c1_i32 : i32 to index
    %c0_18 = arith.constant 0 : index
    %33 = vector.load %arg11[%32, %c0_18] : memref<8x128xf32, #tpu.memory_space<vmem>>, vector<1x128xf32>
    %34 = arith.addf %31, %33 : vector<1x128xf32>
    %35 = arith.negf %34 : vector<1x128xf32>
    %36 = math.exp %35 : vector<1x128xf32>
    %cst_19 = arith.constant 1.000000e+00 : f32
    %37 = vector.broadcast %cst_19 : f32 to vector<1x128xf32>
    %38 = arith.addf %37, %36 : vector<1x128xf32>
    %39 = arith.divf %37, %38 : vector<1x128xf32>
    %40 = math.tanh %34 : vector<1x128xf32>
    %41 = vector.extract_strided_slice %39 {offsets = [0, 0], sizes = [1, 32], strides = [1, 1]} : vector<1x128xf32> to vector<1x32xf32>
    %42 = vector.extract_strided_slice %39 {offsets = [0, 32], sizes = [1, 32], strides = [1, 1]} : vector<1x128xf32> to vector<1x32xf32>
    %43 = vector.extract_strided_slice %40 {offsets = [0, 64], sizes = [1, 32], strides = [1, 1]} : vector<1x128xf32> to vector<1x32xf32>
    %44 = vector.extract_strided_slice %39 {offsets = [0, 96], sizes = [1, 32], strides = [1, 1]} : vector<1x128xf32> to vector<1x32xf32>
    %45 = arith.mulf %41, %26 : vector<1x32xf32>
    %46 = arith.mulf %42, %43 : vector<1x32xf32>
    %47 = arith.addf %45, %46 : vector<1x32xf32>
    %48 = math.tanh %47 : vector<1x32xf32>
    %49 = arith.mulf %44, %48 : vector<1x32xf32>
    %50 = arith.index_cast %c1_i32 : i32 to index
    %c0_20 = arith.constant 0 : index
    %51 = vector.load %arg12[%50, %c0_20] : memref<8x32xf32, #tpu.memory_space<vmem>>, vector<1x32xf32>
    tpu.vector_store %arg12[%50, %c0_20], %49 {strides = array<i32>} : memref<8x32xf32, #tpu.memory_space<vmem>>, vector<1x32xf32>,
    %c2_i32 = arith.constant 2 : i32
    %cst_21 = arith.constant dense<0.000000e+00> : vector<1x128xf32>
    %52 = tpu.matmul %49, %7, %cst_21 {dimension_numbers = #tpu.dot_dimension_numbers<[1], [0], [0], [1], [0, 0, 1, 1], [], []>} : vector<1x32xf32>, vector<32x128xf32>, vector<1x128xf32> -> vector<1x128xf32>
    %53 = arith.index_cast %c2_i32 : i32 to index
    %c0_22 = arith.constant 0 : index
    %54 = vector.load %arg11[%53, %c0_22] : memref<8x128xf32, #tpu.memory_space<vmem>>, vector<1x128xf32>
    %55 = arith.addf %52, %54 : vector<1x128xf32>
    %56 = arith.negf %55 : vector<1x128xf32>
    %57 = math.exp %56 : vector<1x128xf32>
    %cst_23 = arith.constant 1.000000e+00 : f32
    %58 = vector.broadcast %cst_23 : f32 to vector<1x128xf32>
    %59 = arith.addf %58, %57 : vector<1x128xf32>
    %60 = arith.divf %58, %59 : vector<1x128xf32>
    %61 = math.tanh %55 : vector<1x128xf32>
    %62 = vector.extract_strided_slice %60 {offsets = [0, 0], sizes = [1, 32], strides = [1, 1]} : vector<1x128xf32> to vector<1x32xf32>
    %63 = vector.extract_strided_slice %60 {offsets = [0, 32], sizes = [1, 32], strides = [1, 1]} : vector<1x128xf32> to vector<1x32xf32>
    %64 = vector.extract_strided_slice %61 {offsets = [0, 64], sizes = [1, 32], strides = [1, 1]} : vector<1x128xf32> to vector<1x32xf32>
    %65 = vector.extract_strided_slice %60 {offsets = [0, 96], sizes = [1, 32], strides = [1, 1]} : vector<1x128xf32> to vector<1x32xf32>
    %66 = arith.mulf %62, %47 : vector<1x32xf32>
    %67 = arith.mulf %63, %64 : vector<1x32xf32>
    %68 = arith.addf %66, %67 : vector<1x32xf32>
    %69 = math.tanh %68 : vector<1x32xf32>
    %70 = arith.mulf %65, %69 : vector<1x32xf32>
    %71 = arith.index_cast %c2_i32 : i32 to index
    %c0_24 = arith.constant 0 : index
    %72 = vector.load %arg12[%71, %c0_24] : memref<8x32xf32, #tpu.memory_space<vmem>>, vector<1x32xf32>
    tpu.vector_store %arg12[%71, %c0_24], %70 {strides = array<i32>} : memref<8x32xf32, #tpu.memory_space<vmem>>, vector<1x32xf32>,
    %c3_i32 = arith.constant 3 : i32
    %cst_25 = arith.constant dense<0.000000e+00> : vector<1x128xf32>
    %73 = tpu.matmul %70, %7, %cst_25 {dimension_numbers = #tpu.dot_dimension_numbers<[1], [0], [0], [1], [0, 0, 1, 1], [], []>} : vector<1x32xf32>, vector<32x128xf32>, vector<1x128xf32> -> vector<1x128xf32>
    %74 = arith.index_cast %c3_i32 : i32 to index
    %c0_26 = arith.constant 0 : index
    %75 = vector.load %arg11[%74, %c0_26] : memref<8x128xf32, #tpu.memory_space<vmem>>, vector<1x128xf32>
    %76 = arith.addf %73, %75 : vector<1x128xf32>
    %77 = arith.negf %76 : vector<1x128xf32>
    %78 = math.exp %77 : vector<1x128xf32>
    %cst_27 = arith.constant 1.000000e+00 : f32
    %79 = vector.broadcast %cst_27 : f32 to vector<1x128xf32>
    %80 = arith.addf %79, %78 : vector<1x128xf32>
    %81 = arith.divf %79, %80 : vector<1x128xf32>
    %82 = math.tanh %76 : vector<1x128xf32>
    %83 = vector.extract_strided_slice %81 {offsets = [0, 0], sizes = [1, 32], strides = [1, 1]} : vector<1x128xf32> to vector<1x32xf32>
    %84 = vector.extract_strided_slice %81 {offsets = [0, 32], sizes = [1, 32], strides = [1, 1]} : vector<1x128xf32> to vector<1x32xf32>
    %85 = vector.extract_strided_slice %82 {offsets = [0, 64], sizes = [1, 32], strides = [1, 1]} : vector<1x128xf32> to vector<1x32xf32>
    %86 = vector.extract_strided_slice %81 {offsets = [0, 96], sizes = [1, 32], strides = [1, 1]} : vector<1x128xf32> to vector<1x32xf32>
    %87 = arith.mulf %83, %68 : vector<1x32xf32>
    %88 = arith.mulf %84, %85 : vector<1x32xf32>
    %89 = arith.addf %87, %88 : vector<1x32xf32>
    %90 = math.tanh %89 : vector<1x32xf32>
    %91 = arith.mulf %86, %90 : vector<1x32xf32>
    %92 = arith.index_cast %c3_i32 : i32 to index
    %c0_28 = arith.constant 0 : index
    %93 = vector.load %arg12[%92, %c0_28] : memref<8x32xf32, #tpu.memory_space<vmem>>, vector<1x32xf32>
    tpu.vector_store %arg12[%92, %c0_28], %91 {strides = array<i32>} : memref<8x32xf32, #tpu.memory_space<vmem>>, vector<1x32xf32>,
    %c4_i32 = arith.constant 4 : i32
    %cst_29 = arith.constant dense<0.000000e+00> : vector<1x128xf32>
    %94 = tpu.matmul %91, %7, %cst_29 {dimension_numbers = #tpu.dot_dimension_numbers<[1], [0], [0], [1], [0, 0, 1, 1], [], []>} : vector<1x32xf32>, vector<32x128xf32>, vector<1x128xf32> -> vector<1x128xf32>
    %95 = arith.index_cast %c4_i32 : i32 to index
    %c0_30 = arith.constant 0 : index
    %96 = vector.load %arg11[%95, %c0_30] : memref<8x128xf32, #tpu.memory_space<vmem>>, vector<1x128xf32>
    %97 = arith.addf %94, %96 : vector<1x128xf32>
    %98 = arith.negf %97 : vector<1x128xf32>
    %99 = math.exp %98 : vector<1x128xf32>
    %cst_31 = arith.constant 1.000000e+00 : f32
    %100 = vector.broadcast %cst_31 : f32 to vector<1x128xf32>
    %101 = arith.addf %100, %99 : vector<1x128xf32>
    %102 = arith.divf %100, %101 : vector<1x128xf32>
    %103 = math.tanh %97 : vector<1x128xf32>
    %104 = vector.extract_strided_slice %102 {offsets = [0, 0], sizes = [1, 32], strides = [1, 1]} : vector<1x128xf32> to vector<1x32xf32>
    %105 = vector.extract_strided_slice %102 {offsets = [0, 32], sizes = [1, 32], strides = [1, 1]} : vector<1x128xf32> to vector<1x32xf32>
    %106 = vector.extract_strided_slice %103 {offsets = [0, 64], sizes = [1, 32], strides = [1, 1]} : vector<1x128xf32> to vector<1x32xf32>
    %107 = vector.extract_strided_slice %102 {offsets = [0, 96], sizes = [1, 32], strides = [1, 1]} : vector<1x128xf32> to vector<1x32xf32>
    %108 = arith.mulf %104, %89 : vector<1x32xf32>
    %109 = arith.mulf %105, %106 : vector<1x32xf32>
    %110 = arith.addf %108, %109 : vector<1x32xf32>
    %111 = math.tanh %110 : vector<1x32xf32>
    %112 = arith.mulf %107, %111 : vector<1x32xf32>
    %113 = arith.index_cast %c4_i32 : i32 to index
    %c0_32 = arith.constant 0 : index
    %114 = vector.load %arg12[%113, %c0_32] : memref<8x32xf32, #tpu.memory_space<vmem>>, vector<1x32xf32>
    tpu.vector_store %arg12[%113, %c0_32], %112 {strides = array<i32>} : memref<8x32xf32, #tpu.memory_space<vmem>>, vector<1x32xf32>,
    %c5_i32 = arith.constant 5 : i32
    %cst_33 = arith.constant dense<0.000000e+00> : vector<1x128xf32>
    %115 = tpu.matmul %112, %7, %cst_33 {dimension_numbers = #tpu.dot_dimension_numbers<[1], [0], [0], [1], [0, 0, 1, 1], [], []>} : vector<1x32xf32>, vector<32x128xf32>, vector<1x128xf32> -> vector<1x128xf32>
    %116 = arith.index_cast %c5_i32 : i32 to index
    %c0_34 = arith.constant 0 : index
    %117 = vector.load %arg11[%116, %c0_34] : memref<8x128xf32, #tpu.memory_space<vmem>>, vector<1x128xf32>
    %118 = arith.addf %115, %117 : vector<1x128xf32>
    %119 = arith.negf %118 : vector<1x128xf32>
    %120 = math.exp %119 : vector<1x128xf32>
    %cst_35 = arith.constant 1.000000e+00 : f32
    %121 = vector.broadcast %cst_35 : f32 to vector<1x128xf32>
    %122 = arith.addf %121, %120 : vector<1x128xf32>
    %123 = arith.divf %121, %122 : vector<1x128xf32>
    %124 = math.tanh %118 : vector<1x128xf32>
    %125 = vector.extract_strided_slice %123 {offsets = [0, 0], sizes = [1, 32], strides = [1, 1]} : vector<1x128xf32> to vector<1x32xf32>
    %126 = vector.extract_strided_slice %123 {offsets = [0, 32], sizes = [1, 32], strides = [1, 1]} : vector<1x128xf32> to vector<1x32xf32>
    %127 = vector.extract_strided_slice %124 {offsets = [0, 64], sizes = [1, 32], strides = [1, 1]} : vector<1x128xf32> to vector<1x32xf32>
    %128 = vector.extract_strided_slice %123 {offsets = [0, 96], sizes = [1, 32], strides = [1, 1]} : vector<1x128xf32> to vector<1x32xf32>
    %129 = arith.mulf %125, %110 : vector<1x32xf32>
    %130 = arith.mulf %126, %127 : vector<1x32xf32>
    %131 = arith.addf %129, %130 : vector<1x32xf32>
    %132 = math.tanh %131 : vector<1x32xf32>
    %133 = arith.mulf %128, %132 : vector<1x32xf32>
    %134 = arith.index_cast %c5_i32 : i32 to index
    %c0_36 = arith.constant 0 : index
    %135 = vector.load %arg12[%134, %c0_36] : memref<8x32xf32, #tpu.memory_space<vmem>>, vector<1x32xf32>
    tpu.vector_store %arg12[%134, %c0_36], %133 {strides = array<i32>} : memref<8x32xf32, #tpu.memory_space<vmem>>, vector<1x32xf32>,
    %c6_i32 = arith.constant 6 : i32
    %cst_37 = arith.constant dense<0.000000e+00> : vector<1x128xf32>
    %136 = tpu.matmul %133, %7, %cst_37 {dimension_numbers = #tpu.dot_dimension_numbers<[1], [0], [0], [1], [0, 0, 1, 1], [], []>} : vector<1x32xf32>, vector<32x128xf32>, vector<1x128xf32> -> vector<1x128xf32>
    %137 = arith.index_cast %c6_i32 : i32 to index
    %c0_38 = arith.constant 0 : index
    %138 = vector.load %arg11[%137, %c0_38] : memref<8x128xf32, #tpu.memory_space<vmem>>, vector<1x128xf32>
    %139 = arith.addf %136, %138 : vector<1x128xf32>
    %140 = arith.negf %139 : vector<1x128xf32>
    %141 = math.exp %140 : vector<1x128xf32>
    %cst_39 = arith.constant 1.000000e+00 : f32
    %142 = vector.broadcast %cst_39 : f32 to vector<1x128xf32>
    %143 = arith.addf %142, %141 : vector<1x128xf32>
    %144 = arith.divf %142, %143 : vector<1x128xf32>
    %145 = math.tanh %139 : vector<1x128xf32>
    %146 = vector.extract_strided_slice %144 {offsets = [0, 0], sizes = [1, 32], strides = [1, 1]} : vector<1x128xf32> to vector<1x32xf32>
    %147 = vector.extract_strided_slice %144 {offsets = [0, 32], sizes = [1, 32], strides = [1, 1]} : vector<1x128xf32> to vector<1x32xf32>
    %148 = vector.extract_strided_slice %145 {offsets = [0, 64], sizes = [1, 32], strides = [1, 1]} : vector<1x128xf32> to vector<1x32xf32>
    %149 = vector.extract_strided_slice %144 {offsets = [0, 96], sizes = [1, 32], strides = [1, 1]} : vector<1x128xf32> to vector<1x32xf32>
    %150 = arith.mulf %146, %131 : vector<1x32xf32>
    %151 = arith.mulf %147, %148 : vector<1x32xf32>
    %152 = arith.addf %150, %151 : vector<1x32xf32>
    %153 = math.tanh %152 : vector<1x32xf32>
    %154 = arith.mulf %149, %153 : vector<1x32xf32>
    %155 = arith.index_cast %c6_i32 : i32 to index
    %c0_40 = arith.constant 0 : index
    %156 = vector.load %arg12[%155, %c0_40] : memref<8x32xf32, #tpu.memory_space<vmem>>, vector<1x32xf32>
    tpu.vector_store %arg12[%155, %c0_40], %154 {strides = array<i32>} : memref<8x32xf32, #tpu.memory_space<vmem>>, vector<1x32xf32>,
    %c7_i32 = arith.constant 7 : i32
    %cst_41 = arith.constant dense<0.000000e+00> : vector<1x128xf32>
    %157 = tpu.matmul %154, %7, %cst_41 {dimension_numbers = #tpu.dot_dimension_numbers<[1], [0], [0], [1], [0, 0, 1, 1], [], []>} : vector<1x32xf32>, vector<32x128xf32>, vector<1x128xf32> -> vector<1x128xf32>
    %158 = arith.index_cast %c7_i32 : i32 to index
    %c0_42 = arith.constant 0 : index
    %159 = vector.load %arg11[%158, %c0_42] : memref<8x128xf32, #tpu.memory_space<vmem>>, vector<1x128xf32>
    %160 = arith.addf %157, %159 : vector<1x128xf32>
    %161 = arith.negf %160 : vector<1x128xf32>
    %162 = math.exp %161 : vector<1x128xf32>
    %cst_43 = arith.constant 1.000000e+00 : f32
    %163 = vector.broadcast %cst_43 : f32 to vector<1x128xf32>
    %164 = arith.addf %163, %162 : vector<1x128xf32>
    %165 = arith.divf %163, %164 : vector<1x128xf32>
    %166 = math.tanh %160 : vector<1x128xf32>
    %167 = vector.extract_strided_slice %165 {offsets = [0, 0], sizes = [1, 32], strides = [1, 1]} : vector<1x128xf32> to vector<1x32xf32>
    %168 = vector.extract_strided_slice %165 {offsets = [0, 32], sizes = [1, 32], strides = [1, 1]} : vector<1x128xf32> to vector<1x32xf32>
    %169 = vector.extract_strided_slice %166 {offsets = [0, 64], sizes = [1, 32], strides = [1, 1]} : vector<1x128xf32> to vector<1x32xf32>
    %170 = vector.extract_strided_slice %165 {offsets = [0, 96], sizes = [1, 32], strides = [1, 1]} : vector<1x128xf32> to vector<1x32xf32>
    %171 = arith.mulf %167, %152 : vector<1x32xf32>
    %172 = arith.mulf %168, %169 : vector<1x32xf32>
    %173 = arith.addf %171, %172 : vector<1x32xf32>
    %174 = math.tanh %173 : vector<1x32xf32>
    %175 = arith.mulf %170, %174 : vector<1x32xf32>
    %176 = arith.index_cast %c7_i32 : i32 to index
    %c0_44 = arith.constant 0 : index
    %177 = vector.load %arg12[%176, %c0_44] : memref<8x32xf32, #tpu.memory_space<vmem>>, vector<1x32xf32>
    tpu.vector_store %arg12[%176, %c0_44], %175 {strides = array<i32>} : memref<8x32xf32, #tpu.memory_space<vmem>>, vector<1x32xf32>,
    %c8_i32 = arith.constant 8 : i32
    %c0_45 = arith.constant 0 : index
    %c0_46 = arith.constant 0 : index
    %178 = vector.load %arg9[%c0_45, %c0_46] : memref<1x32xf32, #tpu.memory_space<vmem>>, vector<1x32xf32>
    tpu.vector_store %arg9[%c0_45, %c0_46], %175 {strides = array<i32>} : memref<1x32xf32, #tpu.memory_space<vmem>>, vector<1x32xf32>,
    %c0_47 = arith.constant 0 : index
    %c0_48 = arith.constant 0 : index
    %179 = vector.load %arg10[%c0_47, %c0_48] : memref<1x32xf32, #tpu.memory_space<vmem>>, vector<1x32xf32>
    tpu.vector_store %arg10[%c0_47, %c0_48], %173 {strides = array<i32>} : memref<1x32xf32, #tpu.memory_space<vmem>>, vector<1x32xf32>,
    %c0_49 = arith.constant 0 : index
    %c0_50 = arith.constant 0 : index
    %180 = vector.load %arg12[%c0_49, %c0_50] : memref<8x32xf32, #tpu.memory_space<vmem>>, vector<8x32xf32>
    %c0_51 = arith.constant 0 : index
    %c0_52 = arith.constant 0 : index
    %181 = vector.load %arg6[%c0_51, %c0_52] : memref<32x10xf32, #tpu.memory_space<vmem>>, vector<32x10xf32>
    %cst_53 = arith.constant dense<0.000000e+00> : vector<8x10xf32>
    %182 = tpu.matmul %180, %181, %cst_53 {dimension_numbers = #tpu.dot_dimension_numbers<[1], [0], [0], [1], [0, 0, 1, 1], [], []>} : vector<8x32xf32>, vector<32x10xf32>, vector<8x10xf32> -> vector<8x10xf32>
    %c0_54 = arith.constant 0 : index
    %c0_55 = arith.constant 0 : index
    %183 = vector.load %arg7[%c0_54, %c0_55] : memref<1x10xf32, #tpu.memory_space<vmem>>, vector<1x10xf32>
    %184 = vector.broadcast %183 : vector<1x10xf32> to vector<8x10xf32>
    %185 = arith.addf %182, %184 : vector<8x10xf32>
    %cst_56 = arith.constant dense<0xFF800000> : vector<8xf32>
    %186 = vector.multi_reduction <maximumf>, %185, %cst_56 [1] : vector<8x10xf32> to vector<8xf32>
    %187 = vector.shape_cast %186 : vector<8xf32> to vector<8x1xf32>
    %188 = vector.broadcast %187 : vector<8x1xf32> to vector<8x10xf32>
    %189 = arith.subf %185, %188 : vector<8x10xf32>
    %190 = math.exp %189 : vector<8x10xf32>
    %cst_57 = arith.constant dense<0.000000e+00> : vector<8xf32>
    %191 = vector.multi_reduction <add>, %190, %cst_57 [1] : vector<8x10xf32> to vector<8xf32>
    %192 = vector.shape_cast %191 : vector<8xf32> to vector<8x1xf32>
    %193 = math.log %192 : vector<8x1xf32>
    %194 = vector.broadcast %193 : vector<8x1xf32> to vector<8x10xf32>
    %195 = arith.subf %189, %194 : vector<8x10xf32>
    %c0_58 = arith.constant 0 : index
    %c0_59 = arith.constant 0 : index
    %196 = vector.load %arg8[%c0_58, %c0_59] : memref<8x10xf32, #tpu.memory_space<vmem>>, vector<8x10xf32>
    tpu.vector_store %arg8[%c0_58, %c0_59], %195 {strides = array<i32>} : memref<8x10xf32, #tpu.memory_space<vmem>>, vector<8x10xf32>,
    return
  }
}

</mosaic_0001>

<llo_original>
// kernel: tpu_custom_call.1
$region0: #{tpu_custom_call.1}
  #allocation0 [shape = 'u32[]', space=smem, size = 0x4, offset = 0x4, fixed_abs, tag = 'smem constant byte address 0x4 - core index']
  #allocation1 [shape = 'u32[72,128]{1,0:T(1,128)}', space=vmem, size = 0x9000, scoped, tag = 'internal scratch']
  #allocation2 [shape = 'f32[8,128]{1,0:T(8,128)}', space=vmem, size = 0x1000, scoped, tag = 'scratch operand']
  #allocation3 [shape = 'f32[8,32]{1,0:T(8,128)}', space=vmem, size = 0x1000, scoped, tag = 'scratch operand']
  %s0 = inlined_call_operand.hbm [shape: f32[8,16], index: 0, kind: input, shape index: {}]
  %s1 = inlined_call_operand.vmem [shape: f32[1,32], index: 1, kind: input, shape index: {}]
  %s2 = inlined_call_operand.vmem [shape: f32[1,32], index: 2, kind: input, shape index: {}]
  %s3 = inlined_call_operand.vmem [shape: f32[32,128], index: 3, kind: input, shape index: {}]
  %s4 = inlined_call_operand.vmem [shape: f32[16,128], index: 4, kind: input, shape index: {}]
  %s5 = inlined_call_operand.vmem [shape: f32[1,128], index: 5, kind: input, shape index: {}]
  %s6 = inlined_call_operand.vmem [shape: f32[32,10], index: 6, kind: input, shape index: {}]
  %s7 = inlined_call_operand.vmem [shape: f32[1,10], index: 7, kind: input, shape index: {}]
  %s8 = inlined_call_operand.hbm [shape: f32[8,10], index: 8, kind: output, shape index: {0}]
  %s9 = inlined_call_operand.hbm [shape: f32[1,32], index: 9, kind: output, shape index: {1}]
  %s10 = inlined_call_operand.hbm [shape: f32[1,32], index: 10, kind: output, shape index: {2}]
  %11 = xla_tuple %s8, %s9, %s10
  %s12 = sld [smem:[#allocation0]]
  $region62: #{tpu_custom_call.1} parent=0
    _
  %s14 = ssub.s32 1, %s12
  %s15 = scalar_select 0, %s14, %s12
  $region1: #{tpu_custom_call.1} parent=0
    #allocation4 [shape = 'u8[4096]{0}', space=vmem, size = 0x1000, scoped, tag = 'input window, operand 0, single buffered']
    #allocation5 [shape = 's32[1]{0}', space=sflag, size = 0x4, scoped, tag = 'scoped memory for tpu_custom_call.1']
    #allocation6 [shape = 's32[1]{0}', space=sflag, size = 0x4, scoped, tag = 'scoped memory for tpu_custom_call.1']
    #allocation7 [shape = 'u8[4096]{0}', space=vmem, size = 0x1000, scoped, tag = 'output window, operand 0, single buffered']
    #allocation8 [shape = 'u8[512]{0}', space=vmem, size = 0x400, scoped, tag = 'output window, operand 1, single buffered']
    #allocation9 [shape = 's32[1]{0}', space=sflag, size = 0x4, scoped, tag = 'scoped memory for tpu_custom_call.1']
    #allocation10 [shape = 'u8[512]{0}', space=vmem, size = 0x400, scoped, tag = 'output window, operand 2, single buffered']
    %16 = vsyncpa [#allocation5], 0
    %17 = vsyncpa [#allocation6], 0
    %18 = vsyncpa [#allocation9], 0
    // Predicated region
    $region2: #{tpu_custom_call.1} parent=1 // pred_check
      _
    $region3: #{tpu_custom_call.1} parent=1 // pred_check_branch
      %20 = sbr.rel (0) target = $region5
    $region4: #{tpu_custom_call.1} parent=1 // pred_region
      %22 = vsyncadd [#allocation5], 0
      %s24 = sshll.u32 %s0, 4
      %s25 = int_to_ptr.hbm [resolvable:$true] %s24
      %s26 = sshll.u32 [#allocation4], 4
      %s27 = int_to_ptr.vmem [resolvable:$true] %s26
      %29 = dma.hbm_to_vmem [thread:$0]  %s25, 128, %s27, [#allocation5]
    $region5: #{tpu_custom_call.1} parent=1 // pred_fallthru
      _
    // Predicated region
    $region6: #{tpu_custom_call.1} parent=1 // pred_check
      _
    $region7: #{tpu_custom_call.1} parent=1 // pred_check_branch
      %31 = sbr.rel (0) target = $region9
    $region8: #{tpu_custom_call.1} parent=1 // pred_region
      _
    $region9: #{tpu_custom_call.1} parent=1 // pred_fallthru
      _
    // Predicated region
    $region10: #{tpu_custom_call.1} parent=1 // pred_check
      _
    $region11: #{tpu_custom_call.1} parent=1 // pred_check_branch
      %33 = sbr.rel (0) target = $region13
    $region12: #{tpu_custom_call.1} parent=1 // pred_region
      _
    $region13: #{tpu_custom_call.1} parent=1 // pred_fallthru
      _
    // Predicated region
    $region14: #{tpu_custom_call.1} parent=1 // pred_check
      _
    $region15: #{tpu_custom_call.1} parent=1 // pred_check_branch
      %35 = sbr.rel (0) target = $region17
    $region16: #{tpu_custom_call.1} parent=1 // pred_region
      _
    $region17: #{tpu_custom_call.1} parent=1 // pred_fallthru
      _
    // Predicated region
    $region18: #{tpu_custom_call.1} parent=1 // pred_check
      _
    $region19: #{tpu_custom_call.1} parent=1 // pred_check_branch
      %37 = sbr.rel (0) target = $region21
    $region20: #{tpu_custom_call.1} parent=1 // pred_region
      _
    $region21: #{tpu_custom_call.1} parent=1 // pred_fallthru
      _
    // Predicated region
    $region22: #{tpu_custom_call.1} parent=1 // pred_check
      _
    $region23: #{tpu_custom_call.1} parent=1 // pred_check_branch
      %39 = sbr.rel (0) target = $region25
    $region24: #{tpu_custom_call.1} parent=1 // pred_region
      _
    $region25: #{tpu_custom_call.1} parent=1 // pred_fallthru
      _
    // Predicated region
    $region26: #{tpu_custom_call.1} parent=1 // pred_check
      _
    $region27: #{tpu_custom_call.1} parent=1 // pred_check_branch
      %41 = sbr.rel (0) target = $region29
    $region28: #{tpu_custom_call.1} parent=1 // pred_region
      _
    $region29: #{tpu_custom_call.1} parent=1 // pred_fallthru
      _
    // Predicated region
    $region30: #{tpu_custom_call.1} parent=1 // pred_check
      _
    $region31: #{tpu_custom_call.1} parent=1 // pred_check_branch
      %43 = sbr.rel (0) target = $region33
    $region32: #{tpu_custom_call.1} parent=1 // pred_region
      _
    $region33: #{tpu_custom_call.1} parent=1 // pred_fallthru
      _
    // Predicated region
    $region34: #{tpu_custom_call.1} parent=1 // pred_check
      _
    $region35: #{tpu_custom_call.1} parent=1 // pred_check_branch
      %45 = sbr.rel (0) target = $region37
    $region36: #{tpu_custom_call.1} parent=1 // pred_region
      %47 = dma.done [#allocation5], 128
    $region37: #{tpu_custom_call.1} parent=1 // pred_fallthru
      _
    %v48 = vld [vmem:[#allocation4] sm:$0xff]
    %v49 = vld [vmem:[%s4] sm:$0xff]
    %v50 = vld [vmem:[%s4 + $0x8] sm:$0xff]
    %v51 = vld [vmem:[%s5] sm:$0x1]
    %v53 = vperm.slane %v51, 0
    %vm55 = vcmask 130048
    %v57 = vsel %vm55, %v48, 0
    %59 = vmatpush.msra.mxu0 0.0
    %60 = vmatpush.msra.mxu0 0.0
    %61 = vmatpush.msra.mxu0 0.0
    %62 = vmatpush.msra.mxu0 0.0
    %63 = vmatpush.msra.mxu0 0.0
    %64 = vmatpush.msra.mxu0 0.0
    %65 = vmatpush.msra.mxu0 0.0
    %66 = vmatpush.msra.mxu0 0.0
    %67 = vmatpush.msra.mxu0 0.0
    %68 = vmatpush.msra.mxu0 0.0
    %69 = vmatpush.msra.mxu0 0.0
    %70 = vmatpush.msra.mxu0 0.0
    %71 = vmatpush.msra.mxu0 0.0
    %72 = vmatpush.msra.mxu0 0.0
    %73 = vmatpush.msra.mxu0 %v50
    %74 = vmatpush.msra.mxu0 %v49
    %75 = vmatmul.f32.gmra.mxu0 %v57
    %v76 = vpop.f32.mrf.mxu0
    %v77 = vadd.f32 %v53, %v76
    %78 = vdwg.mxu0
    %79 = vst [vmem:[#allocation2] sm:$0xff] %v77
    %v80 = vld [vmem:[%s3] sm:$0xff]
    %v81 = vld [vmem:[%s3 + $0x8] sm:$0xff]
    %v82 = vld [vmem:[%s3 + $0x10] sm:$0xff]
    %v83 = vld [vmem:[%s3 + $0x18] sm:$0xff]
    %v84 = vld [vmem:[%s1] sm:$0x1]
    %v85 = vld [vmem:[%s2] sm:$0x1]
    %v86 = vld [vmem:[#allocation2] sm:$0x1]
    %vm87 = vcmask 261120
    %v89 = vsel %vm87, %v84, 0
    %91 = vmatpush.msra.mxu0 0.0
    %92 = vmatpush.msra.mxu0 0.0
    %93 = vmatpush.msra.mxu0 0.0
    %94 = vmatpush.msra.mxu0 0.0
    %95 = vmatpush.msra.mxu0 0.0
    %96 = vmatpush.msra.mxu0 0.0
    %97 = vmatpush.msra.mxu0 0.0
    %98 = vmatpush.msra.mxu0 0.0
    %99 = vmatpush.msra.mxu0 0.0
    %100 = vmatpush.msra.mxu0 0.0
    %101 = vmatpush.msra.mxu0 0.0
    %102 = vmatpush.msra.mxu0 0.0
    %103 = vmatpush.msra.mxu0 %v83
    %104 = vmatpush.msra.mxu0 %v82
    %105 = vmatpush.msra.mxu0 %v81
    %106 = vmatpush.msra.mxu0 %v80
    %107 = vmatmul.f32.gmra.mxu0 %v89
    %v108 = vpop.f32.mrf.mxu0
    %v109 = vadd.f32 %v86, %v108
    %110 = vdwg.mxu0
    %v111 = vxor.u32 %v109, 2147483648
    %v112 = vmul.f32 %v111, 1.442695
    %v113 = vpow.pop %v112
    %v114 = vadd.f32 %v113, 1.0
    %v115 = vrcp.pop %v114
    %v116 = vmul.f32 %v114, %v115
    %v117 = vsub.f32 1.0, %v116
    %v118 = vmul.f32 %v115, %v117
    %v119 = vadd.f32 %v115, %v118
    %vm120 = vweird.f32 %v114
    %vm121 = vweird.f32 %v115
    %vm122 = vmor %vm120, %vm121
    %v123 = vsel %vm122, %v115, %v119
    %v124 = vand.u32 2147483647, %v114
    %vm125 = vcmp.eq.f32.partialorder %v124, 8.507059e+37
    %v126 = vand.u32 %v114, 2147483648
    %v127 = vor.u32 1.1754944e-38, %v126
    %v128 = vsel %vm125, %v127, %v123
    %v129 = vmul.f32 1.0, %v128
    %v130 = vtanh.pop %v109
    %v131 = vmul.f32 %v129, %v85
    %133 = vrot.lane.b32.xlu0 %v130, 96
    %v134 = vpop.permute.xlu0 %133
    %v136 = vmul.f32 %v129, %v134
    %138 = vrot.lane.b32.xlu0 %v136, 96
    %v139 = vpop.permute.xlu0 %138
    %v141 = vadd.f32 %v131, %v139
    %v142 = vtanh.pop %v141
    %144 = vrot.lane.b32.xlu0 %v142, 96
    %v145 = vpop.permute.xlu0 %144
    %v147 = vmul.f32 %v129, %v145
    %149 = vrot.lane.b32.xlu0 %v147, 32
    %v150 = vpop.permute.xlu0 %149
    %vm152 = vcmask 253952
    %153 = vst.msk [vmem:[#allocation3] sm:$0x1] %vm152, %v150
    %v154 = vld [vmem:[#allocation2 + $0x1] sm:$0x1]
    %v155 = vsel %vm87, %v150, 0
    %157 = vmatpush.msra.mxu0 0.0
    %158 = vmatpush.msra.mxu0 0.0
    %159 = vmatpush.msra.mxu0 0.0
    %160 = vmatpush.msra.mxu0 0.0
    %161 = vmatpush.msra.mxu0 0.0
    %162 = vmatpush.msra.mxu0 0.0
    %163 = vmatpush.msra.mxu0 0.0
    %164 = vmatpush.msra.mxu0 0.0
    %165 = vmatpush.msra.mxu0 0.0
    %166 = vmatpush.msra.mxu0 0.0
    %167 = vmatpush.msra.mxu0 0.0
    %168 = vmatpush.msra.mxu0 0.0
    %169 = vmatpush.msra.mxu0 %v83
    %170 = vmatpush.msra.mxu0 %v82
    %171 = vmatpush.msra.mxu0 %v81
    %172 = vmatpush.msra.mxu0 %v80
    %173 = vmatmul.f32.gmra.mxu0 %v155
    %v174 = vpop.f32.mrf.mxu0
    %v175 = vadd.f32 %v154, %v174
    %176 = vdwg.mxu0
    %v177 = vxor.u32 %v175, 2147483648
    %v178 = vmul.f32 %v177, 1.442695
    %v179 = vpow.pop %v178
    %v180 = vadd.f32 %v179, 1.0
    %v181 = vrcp.pop %v180
    %v182 = vmul.f32 %v180, %v181
    %v183 = vsub.f32 1.0, %v182
    %v184 = vmul.f32 %v181, %v183
    %v185 = vadd.f32 %v181, %v184
    %vm186 = vweird.f32 %v180
    %vm187 = vweird.f32 %v181
    %vm188 = vmor %vm186, %vm187
    %v189 = vsel %vm188, %v181, %v185
    %v190 = vand.u32 2147483647, %v180
    %vm191 = vcmp.eq.f32.partialorder %v190, 8.507059e+37
    %v192 = vand.u32 %v180, 2147483648
    %v193 = vor.u32 1.1754944e-38, %v192
    %v194 = vsel %vm191, %v193, %v189
    %v195 = vmul.f32 1.0, %v194
    %v196 = vtanh.pop %v175
    %v197 = vmul.f32 %v195, %v141
    %199 = vrot.lane.b32.xlu0 %v196, 96
    %v200 = vpop.permute.xlu0 %199
    %v202 = vmul.f32 %v195, %v200
    %204 = vrot.lane.b32.xlu0 %v202, 96
    %v205 = vpop.permute.xlu0 %204
    %v207 = vadd.f32 %v197, %v205
    %v208 = vtanh.pop %v207
    %210 = vrot.lane.b32.xlu0 %v208, 96
    %v211 = vpop.permute.xlu0 %210
    %v213 = vmul.f32 %v195, %v211
    %215 = vrot.lane.b32.xlu0 %v213, 32
    %v216 = vpop.permute.xlu0 %215
    %218 = vst.msk [vmem:[#allocation3 + $0x1] sm:$0x1] %vm152, %v216
    %v219 = vld [vmem:[#allocation2 + $0x2] sm:$0x1]
    %v220 = vsel %vm87, %v216, 0
    %222 = vmatpush.msra.mxu0 0.0
    %223 = vmatpush.msra.mxu0 0.0
    %224 = vmatpush.msra.mxu0 0.0
    %225 = vmatpush.msra.mxu0 0.0
    %226 = vmatpush.msra.mxu0 0.0
    %227 = vmatpush.msra.mxu0 0.0
    %228 = vmatpush.msra.mxu0 0.0
    %229 = vmatpush.msra.mxu0 0.0
    %230 = vmatpush.msra.mxu0 0.0
    %231 = vmatpush.msra.mxu0 0.0
    %232 = vmatpush.msra.mxu0 0.0
    %233 = vmatpush.msra.mxu0 0.0
    %234 = vmatpush.msra.mxu0 %v83
    %235 = vmatpush.msra.mxu0 %v82
    %236 = vmatpush.msra.mxu0 %v81
    %237 = vmatpush.msra.mxu0 %v80
    %238 = vmatmul.f32.gmra.mxu0 %v220
    %v239 = vpop.f32.mrf.mxu0
    %v240 = vadd.f32 %v219, %v239
    %241 = vdwg.mxu0
    %v242 = vxor.u32 %v240, 2147483648
    %v243 = vmul.f32 %v242, 1.442695
    %v244 = vpow.pop %v243
    %v245 = vadd.f32 %v244, 1.0
    %v246 = vrcp.pop %v245
    %v247 = vmul.f32 %v245, %v246
    %v248 = vsub.f32 1.0, %v247
    %v249 = vmul.f32 %v246, %v248
    %v250 = vadd.f32 %v246, %v249
    %vm251 = vweird.f32 %v245
    %vm252 = vweird.f32 %v246
    %vm253 = vmor %vm251, %vm252
    %v254 = vsel %vm253, %v246, %v250
    %v255 = vand.u32 2147483647, %v245
    %vm256 = vcmp.eq.f32.partialorder %v255, 8.507059e+37
    %v257 = vand.u32 %v245, 2147483648
    %v258 = vor.u32 1.1754944e-38, %v257
    %v259 = vsel %vm256, %v258, %v254
    %v260 = vmul.f32 1.0, %v259
    %v261 = vtanh.pop %v240
    %v262 = vmul.f32 %v260, %v207
    %264 = vrot.lane.b32.xlu0 %v261, 96
    %v265 = vpop.permute.xlu0 %264
    %v267 = vmul.f32 %v260, %v265
    %269 = vrot.lane.b32.xlu0 %v267, 96
    %v270 = vpop.permute.xlu0 %269
    %v272 = vadd.f32 %v262, %v270
    %v273 = vtanh.pop %v272
    %275 = vrot.lane.b32.xlu0 %v273, 96
    %v276 = vpop.permute.xlu0 %275
    %v278 = vmul.f32 %v260, %v276
    %280 = vrot.lane.b32.xlu0 %v278, 32
    %v281 = vpop.permute.xlu0 %280
    %283 = vst.msk [vmem:[#allocation3 + $0x2] sm:$0x1] %vm152, %v281
    %v284 = vld [vmem:[#allocation2 + $0x3] sm:$0x1]
    %v285 = vsel %vm87, %v281, 0
    %287 = vmatpush.msra.mxu0 0.0
    %288 = vmatpush.msra.mxu0 0.0
    %289 = vmatpush.msra.mxu0 0.0
    %290 = vmatpush.msra.mxu0 0.0
    %291 = vmatpush.msra.mxu0 0.0
    %292 = vmatpush.msra.mxu0 0.0
    %293 = vmatpush.msra.mxu0 0.0
    %294 = vmatpush.msra.mxu0 0.0
    %295 = vmatpush.msra.mxu0 0.0
    %296 = vmatpush.msra.mxu0 0.0
    %297 = vmatpush.msra.mxu0 0.0
    %298 = vmatpush.msra.mxu0 0.0
    %299 = vmatpush.msra.mxu0 %v83
    %300 = vmatpush.msra.mxu0 %v82
    %301 = vmatpush.msra.mxu0 %v81
    %302 = vmatpush.msra.mxu0 %v80
    %303 = vmatmul.f32.gmra.mxu0 %v285
    %v304 = vpop.f32.mrf.mxu0
    %v305 = vadd.f32 %v284, %v304
    %306 = vdwg.mxu0
    %v307 = vxor.u32 %v305, 2147483648
    %v308 = vmul.f32 %v307, 1.442695
    %v309 = vpow.pop %v308
    %v310 = vadd.f32 %v309, 1.0
    %v311 = vrcp.pop %v310
    %v312 = vmul.f32 %v310, %v311
    %v313 = vsub.f32 1.0, %v312
    %v314 = vmul.f32 %v311, %v313
    %v315 = vadd.f32 %v311, %v314
    %vm316 = vweird.f32 %v310
    %vm317 = vweird.f32 %v311
    %vm318 = vmor %vm316, %vm317
    %v319 = vsel %vm318, %v311, %v315
    %v320 = vand.u32 2147483647, %v310
    %vm321 = vcmp.eq.f32.partialorder %v320, 8.507059e+37
    %v322 = vand.u32 %v310, 2147483648
    %v323 = vor.u32 1.1754944e-38, %v322
    %v324 = vsel %vm321, %v323, %v319
    %v325 = vmul.f32 1.0, %v324
    %v326 = vtanh.pop %v305
    %v327 = vmul.f32 %v325, %v272
    %329 = vrot.lane.b32.xlu0 %v326, 96
    %v330 = vpop.permute.xlu0 %329
    %v332 = vmul.f32 %v325, %v330
    %334 = vrot.lane.b32.xlu0 %v332, 96
    %v335 = vpop.permute.xlu0 %334
    %v337 = vadd.f32 %v327, %v335
    %v338 = vtanh.pop %v337
    %340 = vrot.lane.b32.xlu0 %v338, 96
    %v341 = vpop.permute.xlu0 %340
    %v343 = vmul.f32 %v325, %v341
    %345 = vrot.lane.b32.xlu0 %v343, 32
    %v346 = vpop.permute.xlu0 %345
    %348 = vst.msk [vmem:[#allocation3 + $0x3] sm:$0x1] %vm152, %v346
    %v349 = vld [vmem:[#allocation2 + $0x4] sm:$0x1]
    %v350 = vsel %vm87, %v346, 0
    %352 = vmatpush.msra.mxu0 0.0
    %353 = vmatpush.msra.mxu0 0.0
    %354 = vmatpush.msra.mxu0 0.0
    %355 = vmatpush.msra.mxu0 0.0
    %356 = vmatpush.msra.mxu0 0.0
    %357 = vmatpush.msra.mxu0 0.0
    %358 = vmatpush.msra.mxu0 0.0
    %359 = vmatpush.msra.mxu0 0.0
    %360 = vmatpush.msra.mxu0 0.0
    %361 = vmatpush.msra.mxu0 0.0
    %362 = vmatpush.msra.mxu0 0.0
    %363 = vmatpush.msra.mxu0 0.0
    %364 = vmatpush.msra.mxu0 %v83
    %365 = vmatpush.msra.mxu0 %v82
    %366 = vmatpush.msra.mxu0 %v81
    %367 = vmatpush.msra.mxu0 %v80
    %368 = vmatmul.f32.gmra.mxu0 %v350
    %v369 = vpop.f32.mrf.mxu0
    %v370 = vadd.f32 %v349, %v369
    %371 = vdwg.mxu0
    %v372 = vxor.u32 %v370, 2147483648
    %v373 = vmul.f32 %v372, 1.442695
    %v374 = vpow.pop %v373
    %v375 = vadd.f32 %v374, 1.0
    %v376 = vrcp.pop %v375
    %v377 = vmul.f32 %v375, %v376
    %v378 = vsub.f32 1.0, %v377
    %v379 = vmul.f32 %v376, %v378
    %v380 = vadd.f32 %v376, %v379
    %vm381 = vweird.f32 %v375
    %vm382 = vweird.f32 %v376
    %vm383 = vmor %vm381, %vm382
    %v384 = vsel %vm383, %v376, %v380
    %v385 = vand.u32 2147483647, %v375
    %vm386 = vcmp.eq.f32.partialorder %v385, 8.507059e+37
    %v387 = vand.u32 %v375, 2147483648
    %v388 = vor.u32 1.1754944e-38, %v387
    %v389 = vsel %vm386, %v388, %v384
    %v390 = vmul.f32 1.0, %v389
    %v391 = vtanh.pop %v370
    %v392 = vmul.f32 %v390, %v337
    %394 = vrot.lane.b32.xlu0 %v391, 96
    %v395 = vpop.permute.xlu0 %394
    %v397 = vmul.f32 %v390, %v395
    %399 = vrot.lane.b32.xlu0 %v397, 96
    %v400 = vpop.permute.xlu0 %399
    %v402 = vadd.f32 %v392, %v400
    %v403 = vtanh.pop %v402
    %405 = vrot.lane.b32.xlu0 %v403, 96
    %v406 = vpop.permute.xlu0 %405
    %v408 = vmul.f32 %v390, %v406
    %410 = vrot.lane.b32.xlu0 %v408, 32
    %v411 = vpop.permute.xlu0 %410
    %413 = vst.msk [vmem:[#allocation3 + $0x4] sm:$0x1] %vm152, %v411
    %v414 = vld [vmem:[#allocation2 + $0x5] sm:$0x1]
    %v415 = vsel %vm87, %v411, 0
    %417 = vmatpush.msra.mxu0 0.0
    %418 = vmatpush.msra.mxu0 0.0
    %419 = vmatpush.msra.mxu0 0.0
    %420 = vmatpush.msra.mxu0 0.0
    %421 = vmatpush.msra.mxu0 0.0
    %422 = vmatpush.msra.mxu0 0.0
    %423 = vmatpush.msra.mxu0 0.0
    %424 = vmatpush.msra.mxu0 0.0
    %425 = vmatpush.msra.mxu0 0.0
    %426 = vmatpush.msra.mxu0 0.0
    %427 = vmatpush.msra.mxu0 0.0
    %428 = vmatpush.msra.mxu0 0.0
    %429 = vmatpush.msra.mxu0 %v83
    %430 = vmatpush.msra.mxu0 %v82
    %431 = vmatpush.msra.mxu0 %v81
    %432 = vmatpush.msra.mxu0 %v80
    %433 = vmatmul.f32.gmra.mxu0 %v415
    %v434 = vpop.f32.mrf.mxu0
    %v435 = vadd.f32 %v414, %v434
    %436 = vdwg.mxu0
    %v437 = vxor.u32 %v435, 2147483648
    %v438 = vmul.f32 %v437, 1.442695
    %v439 = vpow.pop %v438
    %v440 = vadd.f32 %v439, 1.0
    %v441 = vrcp.pop %v440
    %v442 = vmul.f32 %v440, %v441
    %v443 = vsub.f32 1.0, %v442
    %v444 = vmul.f32 %v441, %v443
    %v445 = vadd.f32 %v441, %v444
    %vm446 = vweird.f32 %v440
    %vm447 = vweird.f32 %v441
    %vm448 = vmor %vm446, %vm447
    %v449 = vsel %vm448, %v441, %v445
    %v450 = vand.u32 2147483647, %v440
    %vm451 = vcmp.eq.f32.partialorder %v450, 8.507059e+37
    %v452 = vand.u32 %v440, 2147483648
    %v453 = vor.u32 1.1754944e-38, %v452
    %v454 = vsel %vm451, %v453, %v449
    %v455 = vmul.f32 1.0, %v454
    %v456 = vtanh.pop %v435
    %v457 = vmul.f32 %v455, %v402
    %459 = vrot.lane.b32.xlu0 %v456, 96
    %v460 = vpop.permute.xlu0 %459
    %v462 = vmul.f32 %v455, %v460
    %464 = vrot.lane.b32.xlu0 %v462, 96
    %v465 = vpop.permute.xlu0 %464
    %v467 = vadd.f32 %v457, %v465
    %v468 = vtanh.pop %v467
    %470 = vrot.lane.b32.xlu0 %v468, 96
    %v471 = vpop.permute.xlu0 %470
    %v473 = vmul.f32 %v455, %v471
    %475 = vrot.lane.b32.xlu0 %v473, 32
    %v476 = vpop.permute.xlu0 %475
    %478 = vst.msk [vmem:[#allocation3 + $0x5] sm:$0x1] %vm152, %v476
    %v479 = vld [vmem:[#allocation2 + $0x6] sm:$0x1]
    %v480 = vsel %vm87, %v476, 0
    %482 = vmatpush.msra.mxu0 0.0
    %483 = vmatpush.msra.mxu0 0.0
    %484 = vmatpush.msra.mxu0 0.0
    %485 = vmatpush.msra.mxu0 0.0
    %486 = vmatpush.msra.mxu0 0.0
    %487 = vmatpush.msra.mxu0 0.0
    %488 = vmatpush.msra.mxu0 0.0
    %489 = vmatpush.msra.mxu0 0.0
    %490 = vmatpush.msra.mxu0 0.0
    %491 = vmatpush.msra.mxu0 0.0
    %492 = vmatpush.msra.mxu0 0.0
    %493 = vmatpush.msra.mxu0 0.0
    %494 = vmatpush.msra.mxu0 %v83
    %495 = vmatpush.msra.mxu0 %v82
    %496 = vmatpush.msra.mxu0 %v81
    %497 = vmatpush.msra.mxu0 %v80
    %498 = vmatmul.f32.gmra.mxu0 %v480
    %v499 = vpop.f32.mrf.mxu0
    %v500 = vadd.f32 %v479, %v499
    %501 = vdwg.mxu0
    %v502 = vxor.u32 %v500, 2147483648
    %v503 = vmul.f32 %v502, 1.442695
    %v504 = vpow.pop %v503
    %v505 = vadd.f32 %v504, 1.0
    %v506 = vrcp.pop %v505
    %v507 = vmul.f32 %v505, %v506
    %v508 = vsub.f32 1.0, %v507
    %v509 = vmul.f32 %v506, %v508
    %v510 = vadd.f32 %v506, %v509
    %vm511 = vweird.f32 %v505
    %vm512 = vweird.f32 %v506
    %vm513 = vmor %vm511, %vm512
    %v514 = vsel %vm513, %v506, %v510
    %v515 = vand.u32 2147483647, %v505
    %vm516 = vcmp.eq.f32.partialorder %v515, 8.507059e+37
    %v517 = vand.u32 %v505, 2147483648
    %v518 = vor.u32 1.1754944e-38, %v517
    %v519 = vsel %vm516, %v518, %v514
    %v520 = vmul.f32 1.0, %v519
    %v521 = vtanh.pop %v500
    %v522 = vmul.f32 %v520, %v467
    %524 = vrot.lane.b32.xlu0 %v521, 96
    %v525 = vpop.permute.xlu0 %524
    %v527 = vmul.f32 %v520, %v525
    %529 = vrot.lane.b32.xlu0 %v527, 96
    %v530 = vpop.permute.xlu0 %529
    %v532 = vadd.f32 %v522, %v530
    %v533 = vtanh.pop %v532
    %535 = vrot.lane.b32.xlu0 %v533, 96
    %v536 = vpop.permute.xlu0 %535
    %v538 = vmul.f32 %v520, %v536
    %540 = vrot.lane.b32.xlu0 %v538, 32
    %v541 = vpop.permute.xlu0 %540
    %543 = vst.msk [vmem:[#allocation3 + $0x6] sm:$0x1] %vm152, %v541
    %v544 = vld [vmem:[#allocation2 + $0x7] sm:$0x1]
    %v545 = vsel %vm87, %v541, 0
    %547 = vmatpush.msra.mxu0 0.0
    %548 = vmatpush.msra.mxu0 0.0
    %549 = vmatpush.msra.mxu0 0.0
    %550 = vmatpush.msra.mxu0 0.0
    %551 = vmatpush.msra.mxu0 0.0
    %552 = vmatpush.msra.mxu0 0.0
    %553 = vmatpush.msra.mxu0 0.0
    %554 = vmatpush.msra.mxu0 0.0
    %555 = vmatpush.msra.mxu0 0.0
    %556 = vmatpush.msra.mxu0 0.0
    %557 = vmatpush.msra.mxu0 0.0
    %558 = vmatpush.msra.mxu0 0.0
    %559 = vmatpush.msra.mxu0 %v83
    %560 = vmatpush.msra.mxu0 %v82
    %561 = vmatpush.msra.mxu0 %v81
    %562 = vmatpush.msra.mxu0 %v80
    %563 = vmatmul.f32.gmra.mxu0 %v545
    %v564 = vpop.f32.mrf.mxu0
    %v565 = vadd.f32 %v544, %v564
    %566 = vdwg.mxu0
    %v567 = vxor.u32 %v565, 2147483648
    %v568 = vmul.f32 %v567, 1.442695
    %v569 = vpow.pop %v568
    %v570 = vadd.f32 %v569, 1.0
    %v571 = vrcp.pop %v570
    %v572 = vmul.f32 %v570, %v571
    %v573 = vsub.f32 1.0, %v572
    %v574 = vmul.f32 %v571, %v573
    %v575 = vadd.f32 %v571, %v574
    %vm576 = vweird.f32 %v570
    %vm577 = vweird.f32 %v571
    %vm578 = vmor %vm576, %vm577
    %v579 = vsel %vm578, %v571, %v575
    %v580 = vand.u32 2147483647, %v570
    %vm581 = vcmp.eq.f32.partialorder %v580, 8.507059e+37
    %v582 = vand.u32 %v570, 2147483648
    %v583 = vor.u32 1.1754944e-38, %v582
    %v584 = vsel %vm581, %v583, %v579
    %v585 = vmul.f32 1.0, %v584
    %v586 = vtanh.pop %v565
    %v587 = vmul.f32 %v585, %v532
    %589 = vrot.lane.b32.xlu0 %v586, 96
    %v590 = vpop.permute.xlu0 %589
    %v592 = vmul.f32 %v585, %v590
    %594 = vrot.lane.b32.xlu0 %v592, 96
    %v595 = vpop.permute.xlu0 %594
    %v597 = vadd.f32 %v587, %v595
    %v598 = vtanh.pop %v597
    %600 = vrot.lane.b32.xlu0 %v598, 96
    %v601 = vpop.permute.xlu0 %600
    %v603 = vmul.f32 %v585, %v601
    %605 = vrot.lane.b32.xlu0 %v603, 32
    %v606 = vpop.permute.xlu0 %605
    %608 = vst.msk [vmem:[#allocation3 + $0x7] sm:$0x1] %vm152, %v606
    %609 = vst.msk [vmem:[#allocation8] sm:$0x1] %vm152, %v606
    %610 = vst.msk [vmem:[#allocation10] sm:$0x1] %vm152, %v597
    %v611 = vld [vmem:[#allocation3] sm:$0xff]
    %v612 = vld [vmem:[%s6] sm:$0xff]
    %v613 = vld [vmem:[%s6 + $0x8] sm:$0xff]
    %v614 = vld [vmem:[%s6 + $0x10] sm:$0xff]
    %v615 = vld [vmem:[%s6 + $0x18] sm:$0xff]
    %v616 = vld [vmem:[%s7] sm:$0x1]
    %v618 = vperm.slane %v616, 0
    %v621 = vsel %vm87, %v611, 0
    %623 = vmatpush.msra.mxu0 0.0
    %624 = vmatpush.msra.mxu0 0.0
    %625 = vmatpush.msra.mxu0 0.0
    %626 = vmatpush.msra.mxu0 0.0
    %627 = vmatpush.msra.mxu0 0.0
    %628 = vmatpush.msra.mxu0 0.0
    %629 = vmatpush.msra.mxu0 0.0
    %630 = vmatpush.msra.mxu0 0.0
    %631 = vmatpush.msra.mxu0 0.0
    %632 = vmatpush.msra.mxu0 0.0
    %633 = vmatpush.msra.mxu0 0.0
    %634 = vmatpush.msra.mxu0 0.0
    %635 = vmatpush.msra.mxu0 %v615
    %636 = vmatpush.msra.mxu0 %v614
    %637 = vmatpush.msra.mxu0 %v613
    %638 = vmatpush.msra.mxu0 %v612
    %639 = vmatmul.f32.gmra.mxu0 %v621
    %v640 = vpop.f32.mrf.mxu0
    %v641 = vadd.f32 %v618, %v640
    %642 = vdwg.mxu0
    %vm643 = vcmask 80896
    %v644 = vsel %vm643, %v641, -inf
    %645 = vmax.xlane.f32.xlu0 %v644
    %v646 = vpop.xlane.xlu0 %645
    %v647 = vsub.f32 %v641, %v646
    %v648 = vmul.f32 %v647, 1.442695
    %v649 = vpow.pop %v648
    %v650 = vsel %vm643, %v649, 0.0
    %651 = vadd.xlane.f32.xlu0 %v650
    %v652 = vpop.xlane.xlu0 %651
    %v653 = vlog2.pop %v652
    %v654 = vmul.f32 %v653, 0.6931472
    %v655 = vsub.f32 %v647, %v654
    %656 = vst.msk [vmem:[#allocation7] sm:$0xff] %vm643, %v655
    // Predicated region
    $region38: #{tpu_custom_call.1} parent=1 // pred_check
      _
    $region39: #{tpu_custom_call.1} parent=1 // pred_check_branch
      %658 = sbr.rel (0) target = $region41
    $region40: #{tpu_custom_call.1} parent=1 // pred_region
      %660 = vsyncadd [#allocation6], 0
      %s662 = sshll.u32 [#allocation7], 4
      %s663 = int_to_ptr.vmem [resolvable:$true] %s662
      %s664 = sshll.u32 %s8, 4
      %s665 = int_to_ptr.hbm [resolvable:$true] %s664
      %667 = dma.vmem_to_hbm [thread:$0]  %s663, 128, %s665, [#allocation6]
    $region41: #{tpu_custom_call.1} parent=1 // pred_fallthru
      _
    // Predicated region
    $region42: #{tpu_custom_call.1} parent=1 // pred_check
      _
    $region43: #{tpu_custom_call.1} parent=1 // pred_check_branch
      %669 = sbr.rel (0) target = $region45
    $region44: #{tpu_custom_call.1} parent=1 // pred_region
      %671 = vsyncadd [#allocation9], 0
      %s673 = sshll.u32 [#allocation8], 4
      %s674 = int_to_ptr.vmem [resolvable:$true] %s673
      %s675 = sshll.u32 %s9, 4
      %s676 = int_to_ptr.hbm [resolvable:$true] %s675
      %678 = dma.vmem_to_hbm [thread:$0]  %s674, 16, %s676, [#allocation9]
    $region45: #{tpu_custom_call.1} parent=1 // pred_fallthru
      _
    // Predicated region
    $region46: #{tpu_custom_call.1} parent=1 // pred_check
      _
    $region47: #{tpu_custom_call.1} parent=1 // pred_check_branch
      %680 = sbr.rel (0) target = $region49
    $region48: #{tpu_custom_call.1} parent=1 // pred_region
      %682 = vsyncadd [#allocation9], 0
      %s684 = sshll.u32 [#allocation10], 4
      %s685 = int_to_ptr.vmem [resolvable:$true] %s684
      %s686 = sshll.u32 %s10, 4
      %s687 = int_to_ptr.hbm [resolvable:$true] %s686
      %689 = dma.vmem_to_hbm [thread:$0]  %s685, 16, %s687, [#allocation9]
    $region49: #{tpu_custom_call.1} parent=1 // pred_fallthru
      _
    // Predicated region
    $region50: #{tpu_custom_call.1} parent=1 // pred_check
      _
    $region51: #{tpu_custom_call.1} parent=1 // pred_check_branch
      %691 = sbr.rel (0) target = $region53
    $region52: #{tpu_custom_call.1} parent=1 // pred_region
      %693 = dma.done [#allocation6], 128
    $region53: #{tpu_custom_call.1} parent=1 // pred_fallthru
      _
    // Predicated region
    $region54: #{tpu_custom_call.1} parent=1 // pred_check
      _
    $region55: #{tpu_custom_call.1} parent=1 // pred_check_branch
      %695 = sbr.rel (0) target = $region57
    $region56: #{tpu_custom_call.1} parent=1 // pred_region
      %697 = dma.done [#allocation9], 16
    $region57: #{tpu_custom_call.1} parent=1 // pred_fallthru
      _
    // Predicated region
    $region58: #{tpu_custom_call.1} parent=1 // pred_check
      _
    $region59: #{tpu_custom_call.1} parent=1 // pred_check_branch
      %699 = sbr.rel (0) target = $region61
    $region60: #{tpu_custom_call.1} parent=1 // pred_region
      %701 = dma.done [#allocation9], 16
    $region61: #{tpu_custom_call.1} parent=1 // pred_fallthru
      _
    %702 = vsyncpa [#allocation5], 1
    %703 = vsyncpa [#allocation6], 1
    %704 = vsyncpa [#allocation9], 1

</llo_original>
